<compile_context>
chip_gen: v6e
topology: v6e:2x2x1
jax: 0.10.0
libtpu: 0.0.40
codegen_flags: <defaults>
</compile_context>

<pallas_src>
import jax
import jax.numpy as jnp
from jax.experimental import pallas as pl
from jax.experimental.pallas import tpu as pltpu


def _round_up(a: int, b: int) -> int:
    return (a + b - 1) // b * b


def mlp_kernel(x_ref, wu_ref, bu_ref, wd_ref, bd_ref, o_ref, acc_ref):
    k = pl.program_id(1)

    @pl.when(k == 0)
    def _():
        acc_ref[...] = jnp.zeros_like(acc_ref)

    # up_proj chunk + bias (MXU, f32 accumulation).
    h = jnp.dot(x_ref[...], wu_ref[...],
                preferred_element_type=jnp.float32) + bu_ref[...]
    # SiLU in f32 (sigmoid on the EUP).
    h = h * jax.nn.sigmoid(h)
    # down_proj chunk, accumulated into the persistent f32 scratch.
    acc_ref[...] += jnp.dot(h.astype(wd_ref.dtype), wd_ref[...],
                            preferred_element_type=jnp.float32)

    @pl.when(k == pl.num_programs(1) - 1)
    def _():
        o_ref[...] = (acc_ref[...] + bd_ref[...]).astype(o_ref.dtype)


def base_mlp(x, w_up, b_up, w_down, b_down, *, tm=256, th=512):
    """x: (M, in). w_up: (in, hidden). w_down: (hidden, out). Biases 1-D or (1, d)."""
    M, in_dim = x.shape
    hidden = w_up.shape[1]
    out_dim = w_down.shape[1]
    b_up = jnp.asarray(b_up).reshape(1, hidden)
    b_down = jnp.asarray(b_down).reshape(1, out_dim)

    # ---- tile sizes & padded dims -------------------------------------
    tm_eff = _round_up(min(tm, _round_up(M, 8)), 8)
    M_p = _round_up(M, tm_eff)

    if hidden <= th:
        th_eff = hidden                      # single chunk == full dim (always legal)
    else:
        th_eff = _round_up(th, 128)          # lane-aligned hidden chunk
    H_p = _round_up(hidden, th_eff)

    out_p = _round_up(out_dim, 128)          # lane-dense output stores

    # ---- zero-pad operands (padding contributes 0 to the real output) ----
    if M_p != M:
        x = jnp.pad(x, ((0, M_p - M), (0, 0)))
    if H_p != hidden:
        w_up = jnp.pad(w_up, ((0, 0), (0, H_p - hidden)))
        b_up = jnp.pad(b_up, ((0, 0), (0, H_p - hidden)))
        w_down = jnp.pad(w_down, ((0, H_p - hidden), (0, 0)))
    if out_p != out_dim:
        w_down = jnp.pad(w_down, ((0, 0), (0, out_p - out_dim)))
        b_down = jnp.pad(b_down, ((0, 0), (0, out_p - out_dim)))

    grid = (M_p // tm_eff, H_p // th_eff)    # (rows: parallel, hidden: reduction)

    # ---- explicit VMEM budget (double-buffered tiles + f32 accumulator) ----
    x_bytes = jnp.dtype(x.dtype).itemsize
    w_bytes = jnp.dtype(w_up.dtype).itemsize
    vmem_est = 2 * (tm_eff * in_dim * x_bytes
                    + in_dim * th_eff * w_bytes
                    + th_eff * out_p * w_bytes
                    + (th_eff + out_p) * 4
                    + tm_eff * out_p * x_bytes) + tm_eff * out_p * 4
    vmem_limit = int(min(max(2 * vmem_est, 16 << 20), 56 << 20))  # v7x-safe ceiling

    cost = pl.CostEstimate(
        flops=2 * M * (in_dim * hidden + hidden * out_dim),
        transcendentals=M * hidden,
        bytes_accessed=(M * in_dim + M * out_dim) * x_bytes
        + (in_dim * hidden + hidden * out_dim + hidden + out_dim) * w_bytes,
    )

    out = pl.pallas_call(
        mlp_kernel,
        out_shape=jax.ShapeDtypeStruct((M_p, out_p), x.dtype),
        grid_spec=pltpu.PrefetchScalarGridSpec(
            num_scalar_prefetch=0,
            grid=grid,
            in_specs=[
                pl.BlockSpec((tm_eff, in_dim), lambda i, k: (i, 0)),   # x row tile
                pl.BlockSpec((in_dim, th_eff), lambda i, k: (0, k)),   # W_up chunk
                pl.BlockSpec((1, th_eff), lambda i, k: (0, k)),        # b_up chunk
                pl.BlockSpec((th_eff, out_p), lambda i, k: (k, 0)),    # W_down chunk
                pl.BlockSpec((1, out_p), lambda i, k: (0, 0)),         # b_down
            ],
            out_specs=pl.BlockSpec((tm_eff, out_p), lambda i, k: (i, 0)),
            scratch_shapes=[pltpu.VMEM((tm_eff, out_p), jnp.float32)],
        ),
        compiler_params=pltpu.CompilerParams(
            dimension_semantics=("parallel", "arbitrary"),
            vmem_limit_bytes=vmem_limit,
        ),
        cost_estimate=cost,
    )(x, w_up, b_up, w_down, b_down)

    return out[:M, :out_dim]


if __name__ == "__main__":
    # Small shapes implied by the module: (batch, seq, input_size) tokens.
    batch, seq = 2, 8
    input_size, hidden_size, output_size = 32, 64, 32

    key = jax.random.PRNGKey(0)
    kx, kwu, kbu, kwd, kbd = jax.random.split(key, 5)

    x = jax.random.normal(kx, (batch, seq, input_size), dtype=jnp.float32)

    # Same shapes as nn.Linear parameters, stored pre-transposed as (in, out).
    w_up = jax.random.normal(kwu, (input_size, hidden_size), jnp.float32) * (1.0 / input_size ** 0.5)
    b_up = jax.random.normal(kbu, (1, hidden_size), jnp.float32) * 0.01
    w_down = jax.random.normal(kwd, (hidden_size, output_size), jnp.float32) * (1.0 / hidden_size ** 0.5)
    b_down = jax.random.normal(kbd, (1, output_size), jnp.float32) * 0.01

    # Flatten leading dims (Linear acts on the last dim only).
    x2d = x.reshape(batch * seq, input_size)

    out2d = base_mlp(x2d, w_up, b_up, w_down, b_down)
    out = out2d.reshape(batch, seq, output_size)
    jax.block_until_ready(out)

    # Pure-JAX reference check.
    h_ref = x2d @ w_up + b_up
    h_ref = h_ref * jax.nn.sigmoid(h_ref)
    ref = (h_ref @ w_down + b_down).reshape(batch, seq, output_size)
    assert jnp.allclose(out, ref, atol=1e-5, rtol=1e-5), "mismatch vs reference"

    print("KERNEL_OK")
</pallas_src>

<mosaic_0001>
module attributes {stable_mosaic.version = 11 : i64} {
  func.func @mlp_kernel(%arg0: i32, %arg1: i32, %arg2: memref<16x32xf32, #tpu.memory_space<vmem>>, %arg3: memref<32x64xf32, #tpu.memory_space<vmem>>, %arg4: memref<1x64xf32, #tpu.memory_space<vmem>>, %arg5: memref<64x128xf32, #tpu.memory_space<vmem>>, %arg6: memref<1x128xf32, #tpu.memory_space<vmem>>, %arg7: memref<16x128xf32, #tpu.memory_space<vmem>>, %arg8: memref<16x128xf32, #tpu.memory_space<vmem>>) attributes {dimension_semantics = [#tpu.dimension_semantics<parallel>, #tpu.dimension_semantics<arbitrary>], iteration_bounds = array<i64: 1, 1>, scalar_prefetch = 0 : i64, scratch_operands = 1 : i64, tpu.core_type = #tpu.core_type<tc>, window_params = [{transform_indices = @transform_0, window_bounds = array<i64: 16, 32>}, {transform_indices = @transform_1, window_bounds = array<i64: 32, 64>}, {transform_indices = @transform_2, window_bounds = array<i64: 1, 64>}, {transform_indices = @transform_3, window_bounds = array<i64: 64, 128>}, {pipeline_mode = #tpu.pipeline_mode<synchronous>, transform_indices = @transform_4, window_bounds = array<i64: 1, 128>}, {transform_indices = @transform_5, window_bounds = array<i64: 16, 128>}]} {
    %c0_i32 = arith.constant 0 : i32
    %0 = arith.cmpi eq, %arg1, %c0_i32 : i32
    %1 = arith.extui %0 : i1 to i32
    %c0_i32_0 = arith.constant 0 : i32
    %2 = arith.cmpi ne, %1, %c0_i32_0 : i32
    scf.if %2 {
      %cst_16 = arith.constant 0.000000e+00 : f32
      %23 = vector.broadcast %cst_16 : f32 to vector<16x128xf32>
      %c0_17 = arith.constant 0 : index
      %c0_18 = arith.constant 0 : index
      %24 = vector.load %arg8[%c0_17, %c0_18] : memref<16x128xf32, #tpu.memory_space<vmem>>, vector<16x128xf32>
      tpu.vector_store %arg8[%c0_17, %c0_18], %23 {strides = array<i32>} : memref<16x128xf32, #tpu.memory_space<vmem>>, vector<16x128xf32>,
    } else {
    }
    %c0 = arith.constant 0 : index
    %c0_1 = arith.constant 0 : index
    %3 = vector.load %arg2[%c0, %c0_1] : memref<16x32xf32, #tpu.memory_space<vmem>>, vector<16x32xf32>
    %c0_2 = arith.constant 0 : index
    %c0_3 = arith.constant 0 : index
    %4 = vector.load %arg3[%c0_2, %c0_3] : memref<32x64xf32, #tpu.memory_space<vmem>>, vector<32x64xf32>
    %cst = arith.constant dense<0.000000e+00> : vector<16x64xf32>
    %5 = tpu.matmul %3, %4, %cst {dimension_numbers = #tpu.dot_dimension_numbers<[1], [0], [0], [1], [0, 0, 1, 1], [], []>} : vector<16x32xf32>, vector<32x64xf32>, vector<16x64xf32> -> vector<16x64xf32>
    %c0_4 = arith.constant 0 : index
    %c0_5 = arith.constant 0 : index
    %6 = vector.load %arg4[%c0_4, %c0_5] : memref<1x64xf32, #tpu.memory_space<vmem>>, vector<1x64xf32>
    %7 = vector.broadcast %6 : vector<1x64xf32> to vector<16x64xf32>
    %8 = arith.addf %5, %7 : vector<16x64xf32>
    %9 = arith.negf %8 : vector<16x64xf32>
    %10 = math.exp %9 : vector<16x64xf32>
    %cst_6 = arith.constant 1.000000e+00 : f32
    %11 = vector.broadcast %cst_6 : f32 to vector<16x64xf32>
    %12 = arith.addf %11, %10 : vector<16x64xf32>
    %13 = arith.divf %11, %12 : vector<16x64xf32>
    %14 = arith.mulf %8, %13 : vector<16x64xf32>
    %c0_7 = arith.constant 0 : index
    %c0_8 = arith.constant 0 : index
    %15 = vector.load %arg8[%c0_7, %c0_8] : memref<16x128xf32, #tpu.memory_space<vmem>>, vector<16x128xf32>
    %c0_9 = arith.constant 0 : index
    %c0_10 = arith.constant 0 : index
    %16 = vector.load %arg5[%c0_9, %c0_10] : memref<64x128xf32, #tpu.memory_space<vmem>>, vector<64x128xf32>
    %cst_11 = arith.constant dense<0.000000e+00> : vector<16x128xf32>
    %17 = tpu.matmul %14, %16, %cst_11 {dimension_numbers = #tpu.dot_dimension_numbers<[1], [0], [0], [1], [0, 0, 1, 1], [], []>} : vector<16x64xf32>, vector<64x128xf32>, vector<16x128xf32> -> vector<16x128xf32>
    %18 = arith.addf %15, %17 : vector<16x128xf32>
    %c0_12 = arith.constant 0 : index
    %c0_13 = arith.constant 0 : index
    %19 = vector.load %arg8[%c0_12, %c0_13] : memref<16x128xf32, #tpu.memory_space<vmem>>, vector<16x128xf32>
    tpu.vector_store %arg8[%c0_12, %c0_13], %18 {strides = array<i32>} : memref<16x128xf32, #tpu.memory_space<vmem>>, vector<16x128xf32>,
    %c0_i32_14 = arith.constant 0 : i32
    %20 = arith.cmpi eq, %arg1, %c0_i32_14 : i32
    %21 = arith.extui %20 : i1 to i32
    %c0_i32_15 = arith.constant 0 : i32
    %22 = arith.cmpi ne, %21, %c0_i32_15 : i32
    scf.if %22 {
      %c0_16 = arith.constant 0 : index
      %c0_17 = arith.constant 0 : index
      %23 = vector.load %arg8[%c0_16, %c0_17] : memref<16x128xf32, #tpu.memory_space<vmem>>, vector<16x128xf32>
      %c0_18 = arith.constant 0 : index
      %c0_19 = arith.constant 0 : index
      %24 = vector.load %arg6[%c0_18, %c0_19] : memref<1x128xf32, #tpu.memory_space<vmem>>, vector<1x128xf32>
      %25 = vector.broadcast %24 : vector<1x128xf32> to vector<16x128xf32>
      %26 = arith.addf %23, %25 : vector<16x128xf32>
      %c0_20 = arith.constant 0 : index
      %c0_21 = arith.constant 0 : index
      %27 = vector.load %arg7[%c0_20, %c0_21] : memref<16x128xf32, #tpu.memory_space<vmem>>, vector<16x128xf32>
      tpu.vector_store %arg7[%c0_20, %c0_21], %26 {strides = array<i32>} : memref<16x128xf32, #tpu.memory_space<vmem>>, vector<16x128xf32>,
    } else {
    }
    return
  }
  func.func @transform_0(%arg0: i32, %arg1: i32) -> (i32, i32) {
    %c0_i32 = arith.constant 0 : i32
    %c0_i32_0 = arith.constant 0 : i32
    return %arg0, %c0_i32 : i32, i32
  }
  func.func @transform_1(%arg0: i32, %arg1: i32) -> (i32, i32) {
    %c0_i32 = arith.constant 0 : i32
    %c0_i32_0 = arith.constant 0 : i32
    return %c0_i32, %arg1 : i32, i32
  }
  func.func @transform_2(%arg0: i32, %arg1: i32) -> (i32, i32) {
    %c0_i32 = arith.constant 0 : i32
    %c0_i32_0 = arith.constant 0 : i32
    return %c0_i32, %arg1 : i32, i32
  }
  func.func @transform_3(%arg0: i32, %arg1: i32) -> (i32, i32) {
    %c0_i32 = arith.constant 0 : i32
    %c0_i32_0 = arith.constant 0 : i32
    return %arg1, %c0_i32 : i32, i32
  }
  func.func @transform_4(%arg0: i32, %arg1: i32) -> (i32, i32) {
    %c0_i32 = arith.constant 0 : i32
    %c0_i32_0 = arith.constant 0 : i32
    %c0_i32_1 = arith.constant 0 : i32
    return %c0_i32, %c0_i32_0 : i32, i32
  }
  func.func @transform_5(%arg0: i32, %arg1: i32) -> (i32, i32) {
    %c0_i32 = arith.constant 0 : i32
    %c0_i32_0 = arith.constant 0 : i32
    return %arg0, %c0_i32 : i32, i32
  }
}

</mosaic_0001>

<llo_original>
// kernel: tpu_custom_call.1
$region0: #{tpu_custom_call.1}
  #allocation0 [shape = 'u32[]', space=smem, size = 0x4, offset = 0x4, fixed_abs, tag = 'smem constant byte address 0x4 - core index']
  #allocation1 [shape = 'u32[144,128]{1,0:T(1,128)}', space=vmem, size = 0x12000, scoped, tag = 'internal scratch']
  #allocation2 [shape = 'f32[16,128]{1,0:T(8,128)}', space=vmem, size = 0x2000, scoped, tag = 'scratch operand']
  %s0 = inlined_call_operand.hbm [shape: f32[16,32], index: 0, kind: input, shape index: {}]
  %s1 = inlined_call_operand.hbm [shape: f32[32,64], index: 1, kind: input, shape index: {}]
  %s2 = inlined_call_operand.vmem [shape: f32[1,64], index: 2, kind: input, shape index: {}]
  %s3 = inlined_call_operand.hbm [shape: f32[64,128], index: 3, kind: input, shape index: {}]
  %s4 = inlined_call_operand.vmem [shape: f32[1,128], index: 4, kind: input, shape index: {}]
  %s5 = inlined_call_operand.hbm [shape: f32[16,128], index: 5, kind: output, shape index: {}]
  %s6 = sld [smem:[#allocation0]]
  $region50: #{tpu_custom_call.1} parent=0
    _
  %s8 = ssub.s32 1, %s6
  %s9 = scalar_select 0, %s8, %s6
  $region1: #{tpu_custom_call.1} parent=0
    #allocation3 [shape = 'u8[8192]{0}', space=vmem, size = 0x2000, scoped, tag = 'input window, operand 0, single buffered']
    #allocation4 [shape = 's32[1]{0}', space=sflag, size = 0x4, scoped, tag = 'scoped memory for tpu_custom_call.1']
    #allocation5 [shape = 's32[1]{0}', space=sflag, size = 0x4, scoped, tag = 'scoped memory for tpu_custom_call.1']
    #allocation6 [shape = 'u8[16384]{0}', space=vmem, size = 0x4000, scoped, tag = 'input window, operand 1, single buffered']
    #allocation7 [shape = 's32[1]{0}', space=sflag, size = 0x4, scoped, tag = 'scoped memory for tpu_custom_call.1']
    #allocation8 [shape = 'u8[32768]{0}', space=vmem, size = 0x8000, scoped, tag = 'input window, operand 3, single buffered']
    #allocation9 [shape = 'u8[8192]{0}', space=vmem, size = 0x2000, scoped, tag = 'output window, operand 0, single buffered']
    %10 = vsyncpa [#allocation4], 0
    %11 = vsyncpa [#allocation7], 0
    %12 = vsyncpa [#allocation5], 0
    // Predicated region
    $region2: #{tpu_custom_call.1} parent=1 // pred_check
      _
    $region3: #{tpu_custom_call.1} parent=1 // pred_check_branch
      %14 = sbr.rel (0) target = $region5
    $region4: #{tpu_custom_call.1} parent=1 // pred_region
      %s16 = ssub.s32 256, 256
      %17 = vsyncadd [#allocation4], %s16
      %s18 = sshll.u32 [#allocation3], 4
      %s19 = int_to_ptr.vmem [resolvable:$true] %s18
      %24 = dma.hbm_to_vmem [thread:$0]  %s0, 256, %s19, [#allocation4], 128, 128, 8
    $region5: #{tpu_custom_call.1} parent=1 // pred_fallthru
      _
    // Predicated region
    $region6: #{tpu_custom_call.1} parent=1 // pred_check
      _
    $region7: #{tpu_custom_call.1} parent=1 // pred_check_branch
      %26 = sbr.rel (0) target = $region9
    $region8: #{tpu_custom_call.1} parent=1 // pred_region
      %s28 = ssub.s32 512, 512
      %29 = vsyncadd [#allocation7], %s28
      %s30 = sshll.u32 [#allocation6], 4
      %s31 = int_to_ptr.vmem [resolvable:$true] %s30
      %36 = dma.hbm_to_vmem [thread:$0]  %s1, 512, %s31, [#allocation7], 128, 128, 8
    $region9: #{tpu_custom_call.1} parent=1 // pred_fallthru
      _
    // Predicated region
    $region10: #{tpu_custom_call.1} parent=1 // pred_check
      _
    $region11: #{tpu_custom_call.1} parent=1 // pred_check_branch
      %38 = sbr.rel (0) target = $region13
    $region12: #{tpu_custom_call.1} parent=1 // pred_region
      _
    $region13: #{tpu_custom_call.1} parent=1 // pred_fallthru
      _
    // Predicated region
    $region14: #{tpu_custom_call.1} parent=1 // pred_check
      _
    $region15: #{tpu_custom_call.1} parent=1 // pred_check_branch
      %40 = sbr.rel (0) target = $region17
    $region16: #{tpu_custom_call.1} parent=1 // pred_region
      %s42 = ssub.s32 1024, 1024
      %43 = vsyncadd [#allocation7], %s42
      %s44 = sshll.u32 [#allocation8], 4
      %s45 = int_to_ptr.vmem [resolvable:$true] %s44
      %50 = dma.hbm_to_vmem [thread:$0]  %s3, 1024, %s45, [#allocation7], 128, 128, 8
    $region17: #{tpu_custom_call.1} parent=1 // pred_fallthru
      _
    // Predicated region
    $region18: #{tpu_custom_call.1} parent=1 // pred_check
      _
    $region19: #{tpu_custom_call.1} parent=1 // pred_check_branch
      %52 = sbr.rel (0) target = $region21
    $region20: #{tpu_custom_call.1} parent=1 // pred_region
      _
    $region21: #{tpu_custom_call.1} parent=1 // pred_fallthru
      _
    // Predicated region
    $region22: #{tpu_custom_call.1} parent=1 // pred_check
      _
    $region23: #{tpu_custom_call.1} parent=1 // pred_check_branch
      %54 = sbr.rel (0) target = $region25
    $region24: #{tpu_custom_call.1} parent=1 // pred_region
      %55 = dma.done [#allocation4], 256
    $region25: #{tpu_custom_call.1} parent=1 // pred_fallthru
      _
    // Predicated region
    $region26: #{tpu_custom_call.1} parent=1 // pred_check
      _
    $region27: #{tpu_custom_call.1} parent=1 // pred_check_branch
      %57 = sbr.rel (0) target = $region29
    $region28: #{tpu_custom_call.1} parent=1 // pred_region
      %58 = dma.done [#allocation7], 512
    $region29: #{tpu_custom_call.1} parent=1 // pred_fallthru
      _
    // Predicated region
    $region30: #{tpu_custom_call.1} parent=1 // pred_check
      _
    $region31: #{tpu_custom_call.1} parent=1 // pred_check_branch
      %60 = sbr.rel (0) target = $region33
    $region32: #{tpu_custom_call.1} parent=1 // pred_region
      %61 = dma.done [#allocation7], 1024
    $region33: #{tpu_custom_call.1} parent=1 // pred_fallthru
      _
    %p62 = scmp.eq.s32.totalorder 0, 0
    // Predicated region
    $region34: #{tpu_custom_call.1} parent=1 // pred_check
      %p63 = pneg %p62
    $region35: #{tpu_custom_call.1} parent=1 // pred_check_branch
      %65 = sbr.rel (%p63) target = $region37
    $region36: #{tpu_custom_call.1} parent=1 // pred_region
      %66 = vst [vmem:[#allocation2] sm:$0xff] 0.0
      %67 = vst [vmem:[#allocation2 + $0x8] sm:$0xff] 0.0
    $region37: #{tpu_custom_call.1} parent=1 // pred_fallthru
      _
    %v68 = vld [vmem:[#allocation3] sm:$0xff]
    %v69 = vld [vmem:[#allocation3 + $0x8] sm:$0xff]
    %v70 = vld [vmem:[#allocation6] sm:$0xff]
    %v71 = vld [vmem:[#allocation6 + $0x8] sm:$0xff]
    %v72 = vld [vmem:[#allocation6 + $0x10] sm:$0xff]
    %v73 = vld [vmem:[#allocation6 + $0x18] sm:$0xff]
    %v74 = vld [vmem:[%s2] sm:$0x1]
    %v76 = vlaneseq
    %v77 = vshrl.u32 %v76, 7
    %v78 = vsub.s32 0, %v77
    %v79 = vrot.slane %v74, %v78
    %vm81 = vcmask 261120
    %v83 = vsel %vm81, %v68, 0
    %v86 = vsel %vm81, %v69, 0
    %88 = vmatprep.subr.mxu0 0.0
    %89 = vmatpush1.msra.mxu0 0.0
    %90 = vmatprep.subr.mxu0 0.0
    %91 = vmatpush1.msra.mxu0 0.0
    %92 = vmatprep.subr.mxu0 0.0
    %93 = vmatpush1.msra.mxu0 0.0
    %94 = vmatprep.subr.mxu0 0.0
    %95 = vmatpush1.msra.mxu0 0.0
    %96 = vmatprep.subr.mxu0 0.0
    %97 = vmatpush1.msra.mxu0 0.0
    %98 = vmatprep.subr.mxu0 0.0
    %99 = vmatpush1.msra.mxu0 0.0
    %100 = vmatprep.subr.mxu0 0.0
    %101 = vmatpush1.msra.mxu0 0.0
    %102 = vmatprep.subr.mxu0 0.0
    %103 = vmatpush1.msra.mxu0 0.0
    %104 = vmatprep.subr.mxu0 0.0
    %105 = vmatpush1.msra.mxu0 0.0
    %106 = vmatprep.subr.mxu0 0.0
    %107 = vmatpush1.msra.mxu0 0.0
    %108 = vmatprep.subr.mxu0 0.0
    %109 = vmatpush1.msra.mxu0 0.0
    %110 = vmatprep.subr.mxu0 0.0
    %111 = vmatpush1.msra.mxu0 0.0
    %112 = vmatprep.subr.mxu0 0.0
    %113 = vmatpush1.msra.mxu0 %v73
    %114 = vmatprep.subr.mxu0 0.0
    %115 = vmatpush1.msra.mxu0 %v72
    %116 = vmatprep.subr.mxu0 0.0
    %117 = vmatpush1.msra.mxu0 %v71
    %118 = vmatprep.subr.mxu0 0.0
    %119 = vmatpush1.msra.mxu0 %v70
    %120 = vmatprep.subr.mxu0 0.0
    %121 = vmatpush2.msra.mxu0 0.0
    %122 = vmatprep.subr.mxu0 0.0
    %123 = vmatpush2.msra.mxu0 0.0
    %124 = vmatprep.subr.mxu0 0.0
    %125 = vmatpush2.msra.mxu0 0.0
    %126 = vmatprep.subr.mxu0 0.0
    %127 = vmatpush2.msra.mxu0 0.0
    %128 = vmatprep.subr.mxu0 0.0
    %129 = vmatpush2.msra.mxu0 0.0
    %130 = vmatprep.subr.mxu0 0.0
    %131 = vmatpush2.msra.mxu0 0.0
    %132 = vmatprep.subr.mxu0 0.0
    %133 = vmatpush2.msra.mxu0 0.0
    %134 = vmatprep.subr.mxu0 0.0
    %135 = vmatpush2.msra.mxu0 0.0
    %136 = vmatprep.subr.mxu0 0.0
    %137 = vmatpush2.msra.mxu0 0.0
    %138 = vmatprep.subr.mxu0 0.0
    %139 = vmatpush2.msra.mxu0 0.0
    %140 = vmatprep.subr.mxu0 0.0
    %141 = vmatpush2.msra.mxu0 0.0
    %142 = vmatprep.subr.mxu0 0.0
    %143 = vmatpush2.msra.mxu0 0.0
    %144 = vmatprep.subr.mxu0 0.0
    %145 = vmatpush2.msra.mxu0 0.0
    %146 = vmatprep.subr.mxu0 0.0
    %147 = vmatpush2.msra.mxu0 0.0
    %148 = vmatprep.subr.mxu0 0.0
    %149 = vmatpush2.msra.mxu0 0.0
    %150 = vmatprep.subr.mxu0 0.0
    %151 = vmatpush2.msra.mxu0 0.0
    %152 = vmatprep.mubr.f32.mxu0 0.0
    %153 = vmatmul.mubr.f32.gmra.mxu0 %v83
    %v154 = vpop.f32.mrf.mxu0
    %v155 = vadd.f32 %v79, %v154
    %v156 = vpop.f32.mrf.mxu0
    %157 = vmatprep.mubr.f32.mxu0 0.0
    %158 = vmatmul.mubr.f32.gmra.mxu0 %v86
    %v159 = vpop.f32.mrf.mxu0
    %v160 = vadd.f32 %v79, %v159
    %v161 = vpop.f32.mrf.mxu0
    %162 = vdwg.mxu0
    %v163 = vxor.u32 %v155, 2147483648
    %v164 = vxor.u32 %v160, 2147483648
    %v165 = vmul.f32 %v163, 1.442695
    %v166 = vpow.pop %v165
    %v167 = vmul.f32 %v164, 1.442695
    %v168 = vpow.pop %v167
    %v169 = vadd.f32 %v166, 1.0
    %v170 = vadd.f32 %v168, 1.0
    %v171 = vrcp.pop %v169
    %v172 = vmul.f32 1.0, %v171
    %v173 = vrcp.pop %v170
    %v174 = vmul.f32 1.0, %v173
    %v175 = vmul.f32 %v155, %v172
    %v176 = vmul.f32 %v160, %v174
    %v177 = vld [vmem:[#allocation2] sm:$0xff]
    %v178 = vld [vmem:[#allocation2 + $0x8] sm:$0xff]
    %v179 = vld [vmem:[#allocation8] sm:$0xff]
    %v180 = vld [vmem:[#allocation8 + $0x8] sm:$0xff]
    %v181 = vld [vmem:[#allocation8 + $0x10] sm:$0xff]
    %v182 = vld [vmem:[#allocation8 + $0x18] sm:$0xff]
    %v183 = vld [vmem:[#allocation8 + $0x20] sm:$0xff]
    %v184 = vld [vmem:[#allocation8 + $0x28] sm:$0xff]
    %v185 = vld [vmem:[#allocation8 + $0x30] sm:$0xff]
    %v186 = vld [vmem:[#allocation8 + $0x38] sm:$0xff]
    %vm187 = vcmask 523264
    %v189 = vsel %vm187, %v175, 0
    %v192 = vsel %vm187, %v176, 0
    %194 = vmatprep.subr.mxu0 0.0
    %195 = vmatpush1.msra.mxu0 0.0
    %196 = vmatprep.subr.mxu0 0.0
    %197 = vmatpush1.msra.mxu0 0.0
    %198 = vmatprep.subr.mxu0 0.0
    %199 = vmatpush1.msra.mxu0 0.0
    %200 = vmatprep.subr.mxu0 0.0
    %201 = vmatpush1.msra.mxu0 0.0
    %202 = vmatprep.subr.mxu0 0.0
    %203 = vmatpush1.msra.mxu0 0.0
    %204 = vmatprep.subr.mxu0 0.0
    %205 = vmatpush1.msra.mxu0 0.0
    %206 = vmatprep.subr.mxu0 0.0
    %207 = vmatpush1.msra.mxu0 0.0
    %208 = vmatprep.subr.mxu0 0.0
    %209 = vmatpush1.msra.mxu0 0.0
    %210 = vmatprep.subr.mxu0 0.0
    %211 = vmatpush1.msra.mxu0 %v186
    %212 = vmatprep.subr.mxu0 0.0
    %213 = vmatpush1.msra.mxu0 %v185
    %214 = vmatprep.subr.mxu0 0.0
    %215 = vmatpush1.msra.mxu0 %v184
    %216 = vmatprep.subr.mxu0 0.0
    %217 = vmatpush1.msra.mxu0 %v183
    %218 = vmatprep.subr.mxu0 0.0
    %219 = vmatpush1.msra.mxu0 %v182
    %220 = vmatprep.subr.mxu0 0.0
    %221 = vmatpush1.msra.mxu0 %v181
    %222 = vmatprep.subr.mxu0 0.0
    %223 = vmatpush1.msra.mxu0 %v180
    %224 = vmatprep.subr.mxu0 0.0
    %225 = vmatpush1.msra.mxu0 %v179
    %226 = vmatprep.subr.mxu0 0.0
    %227 = vmatpush2.msra.mxu0 0.0
    %228 = vmatprep.subr.mxu0 0.0
    %229 = vmatpush2.msra.mxu0 0.0
    %230 = vmatprep.subr.mxu0 0.0
    %231 = vmatpush2.msra.mxu0 0.0
    %232 = vmatprep.subr.mxu0 0.0
    %233 = vmatpush2.msra.mxu0 0.0
    %234 = vmatprep.subr.mxu0 0.0
    %235 = vmatpush2.msra.mxu0 0.0
    %236 = vmatprep.subr.mxu0 0.0
    %237 = vmatpush2.msra.mxu0 0.0
    %238 = vmatprep.subr.mxu0 0.0
    %239 = vmatpush2.msra.mxu0 0.0
    %240 = vmatprep.subr.mxu0 0.0
    %241 = vmatpush2.msra.mxu0 0.0
    %242 = vmatprep.subr.mxu0 0.0
    %243 = vmatpush2.msra.mxu0 0.0
    %244 = vmatprep.subr.mxu0 0.0
    %245 = vmatpush2.msra.mxu0 0.0
    %246 = vmatprep.subr.mxu0 0.0
    %247 = vmatpush2.msra.mxu0 0.0
    %248 = vmatprep.subr.mxu0 0.0
    %249 = vmatpush2.msra.mxu0 0.0
    %250 = vmatprep.subr.mxu0 0.0
    %251 = vmatpush2.msra.mxu0 0.0
    %252 = vmatprep.subr.mxu0 0.0
    %253 = vmatpush2.msra.mxu0 0.0
    %254 = vmatprep.subr.mxu0 0.0
    %255 = vmatpush2.msra.mxu0 0.0
    %256 = vmatprep.subr.mxu0 0.0
    %257 = vmatpush2.msra.mxu0 0.0
    %258 = vmatprep.mubr.f32.mxu0 0.0
    %259 = vmatmul.mubr.f32.gmra.mxu0 %v189
    %v260 = vpop.f32.mrf.mxu0
    %v261 = vadd.f32 0.0, %v260
    %v262 = vpop.f32.mrf.mxu0
    %263 = vmatprep.mubr.f32.mxu0 0.0
    %264 = vmatmul.mubr.f32.gmra.mxu0 %v192
    %v265 = vpop.f32.mrf.mxu0
    %v266 = vadd.f32 0.0, %v265
    %v267 = vpop.f32.mrf.mxu0
    %268 = vdwg.mxu0
    %v269 = vadd.f32 %v177, %v261
    %v270 = vadd.f32 %v178, %v266
    %271 = vst [vmem:[#allocation2] sm:$0xff] %v269
    %272 = vst [vmem:[#allocation2 + $0x8] sm:$0xff] %v270
    // Predicated region
    $region38: #{tpu_custom_call.1} parent=1 // pred_check
      %p273 = pneg %p62
    $region39: #{tpu_custom_call.1} parent=1 // pred_check_branch
      %275 = sbr.rel (%p273) target = $region41
    $region40: #{tpu_custom_call.1} parent=1 // pred_region
      %v276 = vld [vmem:[#allocation2] sm:$0xff]
      %v277 = vld [vmem:[#allocation2 + $0x8] sm:$0xff]
      %v278 = vld [vmem:[%s4] sm:$0x1]
      %v280 = vlaneseq
      %v281 = vshrl.u32 %v280, 7
      %v282 = vsub.s32 0, %v281
      %v283 = vrot.slane %v278, %v282
      %v285 = vadd.f32 %v276, %v283
      %v286 = vadd.f32 %v277, %v283
      %287 = vst [vmem:[#allocation9] sm:$0xff] %v285
      %288 = vst [vmem:[#allocation9 + $0x8] sm:$0xff] %v286
    $region41: #{tpu_custom_call.1} parent=1 // pred_fallthru
      _
    // Predicated region
    $region42: #{tpu_custom_call.1} parent=1 // pred_check
      _
    $region43: #{tpu_custom_call.1} parent=1 // pred_check_branch
      %290 = sbr.rel (0) target = $region45
    $region44: #{tpu_custom_call.1} parent=1 // pred_region
      %s292 = ssub.s32 256, 256
      %293 = vsyncadd [#allocation5], %s292
      %s294 = sshll.u32 [#allocation9], 4
      %s295 = int_to_ptr.vmem [resolvable:$true] %s294
      %300 = dma.vmem_to_hbm [thread:$0]  %s295, 256, %s5, [#allocation5], 128, 128, 8
    $region45: #{tpu_custom_call.1} parent=1 // pred_fallthru
      _
    // Predicated region
    $region46: #{tpu_custom_call.1} parent=1 // pred_check
      _
    $region47: #{tpu_custom_call.1} parent=1 // pred_check_branch
      %302 = sbr.rel (0) target = $region49
    $region48: #{tpu_custom_call.1} parent=1 // pred_region
      %303 = dma.done [#allocation5], 256
    $region49: #{tpu_custom_call.1} parent=1 // pred_fallthru
      _
    %304 = vsyncpa [#allocation4], 1
    %305 = vsyncpa [#allocation7], 1
    %306 = vsyncpa [#allocation5], 1

</llo_original>
